<compile_context>
chip_gen: v7x
topology: tpu7x:2x2x1
jax: 0.10.0
libtpu: 0.0.40
codegen_flags: <defaults>
</compile_context>

<pallas_src>
import functools
import math

import jax
import jax.numpy as jnp
from jax.experimental import pallas as pl
from jax.experimental.pallas import tpu as pltpu


# ------------------------------ small helpers ------------------------------ #

def _round_up(x, m):
    return ((x + m - 1) // m) * m


def _padded_bytes(shape, dtype):
    """VMEM footprint estimate with dtype-dependent (sublane, 128) tile padding."""
    itemsize = jnp.dtype(dtype).itemsize
    sub = max(8, 32 // itemsize)          # f32: 8, bf16: 16, int8/fp8: 32 rows/tile
    s = list(shape)
    if len(s) >= 2:
        s[-2] = _round_up(s[-2], sub)
    s[-1] = _round_up(s[-1], 128)
    total = 1
    for d in s:
        total *= d
    return total * itemsize


_DEVICE_KIND = None
_VMEM_CAP = None


def _device_kind():
    global _DEVICE_KIND
    if _DEVICE_KIND is None:
        try:
            _DEVICE_KIND = jax.devices()[0].device_kind.lower()
        except Exception:
            _DEVICE_KIND = ""
    return _DEVICE_KIND


def _vmem_capacity_bytes():
    """Physical VMEM per TensorCore (conservative fallback = 64 MiB, v7x)."""
    global _VMEM_CAP
    if _VMEM_CAP is not None:
        return _VMEM_CAP
    cap = None
    try:
        cap = int(pltpu.get_tpu_info().vmem_capacity_bytes)
    except Exception:
        cap = None
    if not cap:
        kind = _device_kind()
        if ("v4" in kind) or ("v5" in kind) or ("v6" in kind):
            cap = 128 * 1024 * 1024
        else:
            cap = 64 * 1024 * 1024
    _VMEM_CAP = cap
    return cap


# ----------------------------- AvgPool2d(2, 2) ----------------------------- #

def _avgpool2x2_kernel(x_ref, o_ref):
    # x_ref: (2, 2, bm, L) -- the 4 window taps, lane-dense L = wo*c
    # o_ref: (bm, L)
    t00 = x_ref[0, 0].astype(jnp.float32)
    t01 = x_ref[0, 1].astype(jnp.float32)
    t10 = x_ref[1, 0].astype(jnp.float32)
    t11 = x_ref[1, 1].astype(jnp.float32)
    o_ref[...] = ((t00 + t01 + t10 + t11) * 0.25).astype(o_ref.dtype)


@jax.jit
def avg_pool_2x2(x_nchw):
    """AvgPool2d(kernel_size=2, stride=2, padding=0). NCHW in, NCHW out."""
    n, c, h, w = x_nchw.shape
    ho, wo = h // 2, w // 2
    x = x_nchw[:, :, :2 * ho, :2 * wo]           # floor-mode crop (no-op if even)

    rows = n * ho
    lane = wo * c                                # lane-dense collapsed last dim
    # NCHW -> (2, 2, rows, wo*c): one XLA copy (transpose+reshape fused).
    #   xt[p, q, b*ho+i, j*c+ch] = x[b, ch, 2i+p, 2j+q]
    xt = x.reshape(n, c, ho, 2, wo, 2).transpose(3, 5, 0, 2, 4, 1)
    xt = xt.reshape(2, 2, rows, lane)

    cap = _vmem_capacity_bytes()
    big = cap >= 100 * 1024 * 1024
    blk_budget = (12 if big else 5) * 1024 * 1024
    itemsize = jnp.dtype(x_nchw.dtype).itemsize
    row_b = 5 * _round_up(lane, 128) * itemsize  # 4 input taps + 1 output row
    bm = blk_budget // max(1, row_b)
    bm = int(min(rows, max(8, bm - bm % 8), 8192 if big else 2048))
    bm = max(1, min(bm, rows))
    grid = (pl.cdiv(rows, bm),)

    in_blk = _padded_bytes((2, 2, bm, lane), x_nchw.dtype)
    out_blk = _padded_bytes((bm, lane), x_nchw.dtype)
    est = 2 * (in_blk + out_blk) + (1 << 20)
    vmem_limit = int(min(cap - 8 * 1024 * 1024, max(32 * 1024 * 1024, est)))

    out = pl.pallas_call(
        _avgpool2x2_kernel,
        out_shape=jax.ShapeDtypeStruct((rows, lane), x_nchw.dtype),
        grid=grid,
        in_specs=[pl.BlockSpec((2, 2, bm, lane), lambda i: (0, 0, i, 0))],
        out_specs=pl.BlockSpec((bm, lane), lambda i: (i, 0)),
        compiler_params=pltpu.CompilerParams(
            dimension_semantics=("parallel",),
            vmem_limit_bytes=vmem_limit),
        cost_estimate=pl.CostEstimate(
            flops=4 * rows * lane,
            transcendentals=0,
            bytes_accessed=(4 * rows * lane + rows * lane) * itemsize),
    )(xt)

    out = out.reshape(n, ho, wo, c)
    # TODO(synk): plumb channels-last through the surrounding model to drop this
    # output transpose and the xt construction above (two full HBM passes).
    return jnp.transpose(out, (0, 3, 1, 2))


# ---------------------- Conv2d(C, C, k=3, s=2, p=1) ------------------------ #

def _conv3x3s2_kernel(xr_ref, w_ref, b_ref, o_ref, acc_ref, *, th, nb):
    # xr_ref: (2, nb*hoP, wo, 3*cin)  H-parity planes, kw lane-stacked
    # w_ref : (3, 3*cin, tn)          per-kh weights (compute dtype)
    # b_ref : (1, tn)                 bias (f32)
    # o_ref : (nb*ho, wo, tn)
    # acc_ref: (th*wo, tn) f32        small per-slab accumulator (VMEM scratch)
    hoP = xr_ref.shape[1] // nb
    ho = o_ref.shape[0] // nb
    wo, tn = o_ref.shape[1], o_ref.shape[2]
    k3 = xr_ref.shape[-1]
    n_slabs = ho // th
    m = th * wo

    def slab(t, carry):
        ib = t // n_slabs
        s = t - ib * n_slabs
        rin = ib * hoP + s * th
        rout = ib * ho + s * th
        # kh=0 -> (parity 0, dh 0); kh=1 -> (parity 1, dh 0); kh=2 -> (parity 0, dh 1).
        # All slices are along major axes (free); reshape merges adjacent dims only.
        x0 = xr_ref[0, pl.ds(rin, th)].reshape(m, k3)
        x1 = xr_ref[1, pl.ds(rin, th)].reshape(m, k3)
        x2 = xr_ref[0, pl.ds(rin + 1, th)].reshape(m, k3)
        acc_ref[...] = jnp.dot(x0, w_ref[0], preferred_element_type=jnp.float32)
        acc_ref[...] += jnp.dot(x1, w_ref[1], preferred_element_type=jnp.float32)
        acc_ref[...] += jnp.dot(x2, w_ref[2], preferred_element_type=jnp.float32)
        out = (acc_ref[...] + b_ref[...]).astype(o_ref.dtype)
        o_ref[pl.ds(rout, th)] = out.reshape(th, wo, tn)
        return carry

    total = nb * n_slabs
    if total <= 8:
        for t in range(total):          # static unroll for tiny trip counts
            slab(t, 0)
    else:
        jax.lax.fori_loop(0, total, slab, 0)


@functools.partial(jax.jit, static_argnames=("compute_dtype",))
def conv3x3_stride2(x_nchw, weight, bias, *, compute_dtype=jnp.bfloat16):
    """Conv2d(inplanes, inplanes, kernel_size=3, stride=2, padding=1).

    weight: (Cout, Cin, 3, 3) OIHW; bias: (Cout,). NCHW in, NCHW out.
    Pass compute_dtype=jnp.float32 for full-precision parity with PyTorch
    (default bf16 operands, f32 MXU accumulation).
    """
    n, c, h, w = x_nchw.shape
    cout = weight.shape[0]
    ho = (h + 1) // 2
    wo = (w + 1) // 2
    hoP = ho + 1
    k3 = 3 * c

    # padding=1; pad H to 2*ho+2 rows and W to 2*wo+1 cols, then build
    #   xr[ph, b*hoP + r, j, kw*c + ci] = xpad[b, ci, 2r+ph, 2j+kw]
    # i.e. the 3 kw taps are lane-stacked (K = 3*cin) and H is split into its
    # two stride-2 parity planes.  One wrapper-side copy (~1.5x input), cast to
    # the MXU compute dtype fused into the same pass.
    xp = jnp.pad(x_nchw, ((0, 0), (0, 0),
                          (1, 2 * ho + 1 - h), (1, 2 * wo - w)))
    taps = jnp.stack([xp[:, :, :, t: t + 2 * wo: 2] for t in range(3)], axis=0)
    taps = taps.reshape(3, n, c, hoP, 2, wo)
    xr = taps.transpose(4, 1, 3, 5, 0, 2).reshape(2, n * hoP, wo, k3)
    xr = xr.astype(compute_dtype)

    # (Cout, Cin, 3, 3) -> (3, 3*Cin, Cout_p); lane-dense Cout padding.
    cout_p = _round_up(cout, 128)
    wm = jnp.transpose(weight, (2, 3, 1, 0)).reshape(3, k3, cout)
    wm = jnp.pad(wm, ((0, 0), (0, 0), (0, cout_p - cout))).astype(compute_dtype)
    bvec = jnp.pad(bias.astype(jnp.float32), (0, cout_p - cout)).reshape(1, cout_p)

    cap = _vmem_capacity_bytes()
    big = cap >= 100 * 1024 * 1024
    blk_budget = (16 if big else 4) * 1024 * 1024

    # Batch grouping: VMEM-budget driven; keep >= 2 batch grid steps whenever
    # n >= 2 so both TensorCores of a 2-TC chip get work.
    nb = 1
    for d in range(1, n + 1):
        if n % d:
            continue
        if d > 1 and n // d < 2:
            continue
        xr_b = _padded_bytes((2, d * hoP, wo, k3), compute_dtype)
        o_b = _padded_bytes((d * ho, wo, 256 if cout_p >= 256 else 128), x_nchw.dtype)
        if xr_b + o_b <= blk_budget:
            nb = d

    # cout tile: lane-dense; tn=128 on v5e (128-wide MXU), 256 where divisible;
    # force a second cout step if the batch grid collapsed to a single step.
    kind = _device_kind()
    tn = 128
    if cout_p % 256 == 0 and cout_p >= 256 and "v5" not in kind:
        tn = 256
    if n // nb == 1 and cout_p // tn == 1 and cout_p >= 256:
        tn = 128
    ncb = cout_p // tn

    # In-kernel M tiling: row slabs of <= 1024 MXU rows (small f32 accumulator).
    th = 1
    for d in range(1, ho + 1):
        if ho % d == 0 and d * wo <= 1024:
            th = d

    # VMEM budget (double-buffered in/out + weights + f32 slab accumulator).
    # TODO(synk): for very large spatial extents (e.g. 256x256 @ high C on v7x)
    # add H-halo spatial tiling via manual double-buffered DMA (BlockSpec cannot
    # express overlapping halo blocks) instead of whole-image xr blocks.
    xr_blk = _padded_bytes((2, nb * hoP, wo, k3), compute_dtype)
    out_blk = _padded_bytes((nb * ho, wo, tn), x_nchw.dtype)
    w_blk = _padded_bytes((3, k3, tn), compute_dtype)
    acc_blk = _padded_bytes((th * wo, tn), jnp.float32)
    est = 2 * xr_blk + 2 * out_blk + 2 * w_blk + acc_blk + (2 << 20)
    vmem_limit = int(min(cap - 8 * 1024 * 1024, max(32 * 1024 * 1024, est)))

    in_itemsize = jnp.dtype(compute_dtype).itemsize
    out_itemsize = jnp.dtype(x_nchw.dtype).itemsize
    kernel = functools.partial(_conv3x3s2_kernel, th=th, nb=nb)

    out = pl.pallas_call(
        kernel,
        out_shape=jax.ShapeDtypeStruct((n * ho, wo, cout_p), x_nchw.dtype),
        grid=(n // nb, ncb),
        in_specs=[
            # xr block index is constant across the inner cout axis -> stays
            # VMEM-resident (no re-DMA per cout tile).
            pl.BlockSpec((2, nb * hoP, wo, k3), lambda b, j: (0, b, 0, 0)),
            pl.BlockSpec((3, k3, tn), lambda b, j: (0, 0, j)),
            pl.BlockSpec((1, tn), lambda b, j: (0, j)),
        ],
        out_specs=pl.BlockSpec((nb * ho, wo, tn), lambda b, j: (b, 0, j)),
        scratch_shapes=[pltpu.VMEM((th * wo, tn), jnp.float32)],
        compiler_params=pltpu.CompilerParams(
            dimension_semantics=("parallel", "parallel"),
            vmem_limit_bytes=vmem_limit),
        cost_estimate=pl.CostEstimate(
            flops=2 * n * ho * wo * 9 * c * cout_p,
            transcendentals=0,
            bytes_accessed=(xr.size * in_itemsize + wm.size * in_itemsize
                            + n * ho * wo * cout_p * out_itemsize)),
    )(xr, wm, bvec)

    out = out[..., :cout].reshape(n, ho, wo, cout)
    # TODO(synk): stay channels-last in the surrounding model to drop this
    # output transpose (the kernel already emits NHWC rows).
    return jnp.transpose(out, (0, 3, 1, 2))


# ----------------------------- Module wrapper ------------------------------ #

class DownSampleBlock:
    """Pallas port of simpleAICV DownSampleBlock (forward semantics only)."""

    def __init__(self, inplanes, use_conv=False, key=None,
                 compute_dtype=jnp.bfloat16):
        self.use_conv = use_conv
        self.compute_dtype = compute_dtype
        if self.use_conv:
            # Deterministic synthetic init mimicking PyTorch Conv2d default
            # (uniform in +/- 1/sqrt(fan_in)); NOT a checkpoint load.
            key = jax.random.PRNGKey(0) if key is None else key
            kw_, kb_ = jax.random.split(key)
            fan_in = inplanes * 3 * 3
            bound = 1.0 / math.sqrt(fan_in)
            self.weight = jax.random.uniform(
                kw_, (inplanes, inplanes, 3, 3), jnp.float32, -bound, bound)
            self.bias = jax.random.uniform(
                kb_, (inplanes,), jnp.float32, -bound, bound)

    def __call__(self, x_nchw):
        if self.use_conv:
            return conv3x3_stride2(x_nchw, self.weight, self.bias,
                                   compute_dtype=self.compute_dtype)
        return avg_pool_2x2(x_nchw)


# --------------------------------- Demo ------------------------------------ #

if __name__ == "__main__":
    key = jax.random.PRNGKey(0)
    kx, kp = jax.random.split(key)
    n, c, h, w = 2, 4, 16, 16
    x = jax.random.normal(kx, (n, c, h, w), dtype=jnp.float32)

    # ---- use_conv=False (AvgPool2d path) ----
    block_pool = DownSampleBlock(inplanes=c, use_conv=False)
    y_pool = jax.block_until_ready(block_pool(x))
    assert y_pool.shape == (n, c, h // 2, w // 2)
    ref_pool = x.reshape(n, c, h // 2, 2, w // 2, 2).mean(axis=(3, 5))
    assert jnp.allclose(y_pool, ref_pool, atol=1e-5, rtol=1e-5), (
        float(jnp.max(jnp.abs(y_pool - ref_pool))))

    # ---- use_conv=True (Conv2d 3x3 stride-2 path, bf16 MXU compute) ----
    block_conv = DownSampleBlock(inplanes=c, use_conv=True, key=kp)
    y_conv = jax.block_until_ready(block_conv(x))
    assert y_conv.shape == (n, c, h // 2, w // 2)
    ref_conv = jax.lax.conv_general_dilated(
        x, block_conv.weight, window_strides=(2, 2),
        padding=((1, 1), (1, 1)),
        dimension_numbers=("NCHW", "OIHW", "NCHW"),
        precision=jax.lax.Precision.HIGHEST,
    ) + block_conv.bias.reshape(1, c, 1, 1)
    # bf16 operand tolerance (f32 accumulation on the MXU).
    assert jnp.allclose(y_conv, ref_conv, atol=2e-2, rtol=2e-2), (
        float(jnp.max(jnp.abs(y_conv - ref_conv))))

    print("KERNEL_OK")
</pallas_src>

<mosaic_0001>
module attributes {stable_mosaic.version = 11 : i64} {
  func.func @_avgpool2x2_kernel(%arg0: i32, %arg1: memref<2x2x16x32xf32, #tpu.memory_space<vmem>>, %arg2: memref<16x32xf32, #tpu.memory_space<vmem>>) attributes {dimension_semantics = [#tpu.dimension_semantics<parallel>], iteration_bounds = array<i64: 1>, scalar_prefetch = 0 : i64, scratch_operands = 0 : i64, tpu.core_type = #tpu.core_type<tc>, window_params = [{transform_indices = @transform_0, window_bounds = array<i64: 2, 2, 16, 32>}, {transform_indices = @transform_1, window_bounds = array<i64: 16, 32>}]} {
    %c0 = arith.constant 0 : index
    %c0_0 = arith.constant 0 : index
    %c0_1 = arith.constant 0 : index
    %c0_2 = arith.constant 0 : index
    %0 = vector.load %arg1[%c0, %c0_0, %c0_1, %c0_2] : memref<2x2x16x32xf32, #tpu.memory_space<vmem>>, vector<1x1x16x32xf32>
    %1 = vector.shape_cast %0 : vector<1x1x16x32xf32> to vector<16x32xf32>
    %c0_3 = arith.constant 0 : index
    %c1 = arith.constant 1 : index
    %c0_4 = arith.constant 0 : index
    %c0_5 = arith.constant 0 : index
    %2 = vector.load %arg1[%c0_3, %c1, %c0_4, %c0_5] : memref<2x2x16x32xf32, #tpu.memory_space<vmem>>, vector<1x1x16x32xf32>
    %3 = vector.shape_cast %2 : vector<1x1x16x32xf32> to vector<16x32xf32>
    %c1_6 = arith.constant 1 : index
    %c0_7 = arith.constant 0 : index
    %c0_8 = arith.constant 0 : index
    %c0_9 = arith.constant 0 : index
    %4 = vector.load %arg1[%c1_6, %c0_7, %c0_8, %c0_9] : memref<2x2x16x32xf32, #tpu.memory_space<vmem>>, vector<1x1x16x32xf32>
    %5 = vector.shape_cast %4 : vector<1x1x16x32xf32> to vector<16x32xf32>
    %c1_10 = arith.constant 1 : index
    %c1_11 = arith.constant 1 : index
    %c0_12 = arith.constant 0 : index
    %c0_13 = arith.constant 0 : index
    %6 = vector.load %arg1[%c1_10, %c1_11, %c0_12, %c0_13] : memref<2x2x16x32xf32, #tpu.memory_space<vmem>>, vector<1x1x16x32xf32>
    %7 = vector.shape_cast %6 : vector<1x1x16x32xf32> to vector<16x32xf32>
    %8 = arith.addf %1, %3 : vector<16x32xf32>
    %9 = arith.addf %8, %5 : vector<16x32xf32>
    %10 = arith.addf %9, %7 : vector<16x32xf32>
    %cst = arith.constant 2.500000e-01 : f32
    %11 = vector.broadcast %cst : f32 to vector<16x32xf32>
    %12 = arith.mulf %10, %11 : vector<16x32xf32>
    %c0_14 = arith.constant 0 : index
    %c0_15 = arith.constant 0 : index
    %13 = vector.load %arg2[%c0_14, %c0_15] : memref<16x32xf32, #tpu.memory_space<vmem>>, vector<16x32xf32>
    tpu.vector_store %arg2[%c0_14, %c0_15], %12 {strides = array<i32>} : memref<16x32xf32, #tpu.memory_space<vmem>>, vector<16x32xf32>,
    return
  }
  func.func @transform_0(%arg0: i32) -> (i32, i32, i32, i32) {
    %c0_i32 = arith.constant 0 : i32
    %c0_i32_0 = arith.constant 0 : i32
    %c0_i32_1 = arith.constant 0 : i32
    %c0_i32_2 = arith.constant 0 : i32
    return %c0_i32, %c0_i32_0, %arg0, %c0_i32_1 : i32, i32, i32, i32
  }
  func.func @transform_1(%arg0: i32) -> (i32, i32) {
    %c0_i32 = arith.constant 0 : i32
    %c0_i32_0 = arith.constant 0 : i32
    return %arg0, %c0_i32 : i32, i32
  }
}

</mosaic_0001>

<llo_original>
// kernel: avg_pool_2x2.1
$region0: #{avg_pool_2x2.1}
  #allocation0 [shape = 'u32[]', space=smem, size = 0x4, offset = 0x4, fixed_abs, tag = 'smem constant byte address 0x4 - core index']
  #allocation1 [shape = 'u32[144,128]{1,0:T(1,128)}', space=vmem, size = 0x12000, scoped, tag = 'internal scratch']
  %s0 = inlined_call_operand.vmem [shape: f32[2,2,16,32], index: 0, kind: input, shape index: {}]
  %s1 = inlined_call_operand.vmem [shape: f32[16,32], index: 1, kind: output, shape index: {}]
  %s2 = sld [smem:[#allocation0]]
  $region14: #{avg_pool_2x2.1} parent=0
    _
  %s4 = ssub.s32 1, %s2
  %s5 = scalar_select 0, %s4, %s2
  // Predicated region
  $region2: #{avg_pool_2x2.1} parent=0 // pred_check
    _
  $region3: #{avg_pool_2x2.1} parent=0 // pred_check_branch
    %7 = sbr.rel (0) target = $region5
  $region4: #{avg_pool_2x2.1} parent=0 // pred_region
    _
  $region5: #{avg_pool_2x2.1} parent=0 // pred_fallthru
    _
  %v8 = vld [vmem:[%s0] sm:$0xff]
  %v9 = vld [vmem:[%s0 + $0x8] sm:$0xff]
  %s10 = scalar_lea.vmem %s0, 16
  %v11 = vld [vmem:[%s10] sm:$0xff]
  %v12 = vld [vmem:[%s10 + $0x8] sm:$0xff]
  %s13 = scalar_lea.vmem %s0, 32
  %v14 = vld [vmem:[%s13] sm:$0xff]
  %v15 = vld [vmem:[%s13 + $0x8] sm:$0xff]
  %s16 = scalar_lea.vmem %s0, 48
  %v17 = vld [vmem:[%s16] sm:$0xff]
  %v18 = vld [vmem:[%s16 + $0x8] sm:$0xff]
  %v19 = vadd.f32 %v8, %v11
  %v20 = vadd.f32 %v9, %v12
  %v21 = vadd.f32 %v19, %v14
  %v22 = vadd.f32 %v20, %v15
  %v23 = vadd.f32 %v21, %v17
  %v24 = vadd.f32 %v22, %v18
  %v25 = vmul.f32 %v23, 0.25
  %v26 = vmul.f32 %v24, 0.25
  %vm27 = vcmask 261120
  %28 = vst.msk [vmem:[%s1] sm:$0xff] %vm27, %v25
  %29 = vst.msk [vmem:[%s1 + $0x8] sm:$0xff] %vm27, %v26
  // Predicated region
  $region6: #{avg_pool_2x2.1} parent=0 // pred_check
    _
  $region7: #{avg_pool_2x2.1} parent=0 // pred_check_branch
    %31 = sbr.rel (0) target = $region9
  $region8: #{avg_pool_2x2.1} parent=0 // pred_region
    _
  $region9: #{avg_pool_2x2.1} parent=0 // pred_fallthru
    _
  // Predicated region
  $region10: #{avg_pool_2x2.1} parent=0 // pred_check
    _
  $region11: #{avg_pool_2x2.1} parent=0 // pred_check_branch
    %33 = sbr.rel (0) target = $region13
  $region12: #{avg_pool_2x2.1} parent=0 // pred_region
    _
  $region13: #{avg_pool_2x2.1} parent=0 // pred_fallthru
    _

</llo_original>
